<compile_context>
chip_gen: v6e
topology: v6e:2x2x1
jax: 0.10.0
libtpu: 0.0.40
codegen_flags: <defaults>
</compile_context>

<pallas_src>
import jax
import jax.numpy as jnp
from jax.experimental import pallas as pl
from jax.experimental.pallas import tpu as pltpu


def _round_up(n, m):
    return ((n + m - 1) // m) * m


def _pick_tile(total, want):
    """Largest multiple of 128 that divides `total` (a multiple of 128) and is
    <= want (never below 128).  Avoids padding waste on the tiled dim."""
    n_blocks = total // 128
    t_blocks = max(1, min(want, total) // 128)
    while n_blocks % t_blocks:
        t_blocks -= 1
    return t_blocks * 128


def _vmem_cap_bytes():
    """Generation-aware VMEM request cap: ~3/4 of physical, never above 64 MiB.
    v7x (64 MiB physical) -> 48 MiB; v5e/v6e (128 MiB) -> 64 MiB."""
    phys = 64 << 20
    try:
        phys = int(pltpu.get_tpu_info().vmem_capacity_bytes)
    except Exception:
        pass
    return min((3 * phys) // 4, 64 << 20)


def _pad_cast_2d(a, rows, cols, dtype):
    """Cast + zero-pad to (rows, cols); skips the copy when already aligned."""
    a = a.astype(dtype)
    r, c = a.shape
    if r == rows and c == cols:
        return a
    return jnp.zeros((rows, cols), dtype).at[:r, :c].set(a)


# --------------------------- fc1: h = relu(x @ w1 + b1) ----------------------
def _make_fc1_kernel(tk, tn):
    def fc1_kernel(x_ref, w1_ref, b1_ref, h_ref, acc_ref):
        j = pl.program_id(0)          # H tile ("parallel")
        k = pl.program_id(1)          # F reduction ("arbitrary", last)

        @pl.when(k == 0)
        def _init():
            # Fold the bias into the accumulator init (once per H tile).
            b1_tile = b1_ref[:, pl.ds(pl.multiple_of(j * tn, tn), tn)]
            acc_ref[...] = jnp.broadcast_to(b1_tile, acc_ref.shape)

        # x is resident in VMEM; slice the current K chunk locally (no re-DMA).
        xk = x_ref[:, pl.ds(pl.multiple_of(k * tk, tk), tk)]
        acc_ref[...] += jnp.dot(xk, w1_ref[...],
                                preferred_element_type=jnp.float32)

        @pl.when(k == pl.num_programs(1) - 1)
        def _finalize():
            h_ref[...] = jnp.maximum(acc_ref[...], 0.0).astype(h_ref.dtype)

    return fc1_kernel


# ----------------------- fc2: out = sigmoid(h @ w2 + b2) ---------------------
def fc2_kernel(h_ref, w2_ref, b2_ref, o_ref, acc_ref):
    k = pl.program_id(0)              # reduction over the hidden dim

    @pl.when(k == 0)
    def _init():
        acc_ref[...] = jnp.broadcast_to(b2_ref[...], acc_ref.shape)

    acc_ref[...] += jnp.dot(h_ref[...], w2_ref[...].astype(jnp.float32),
                            preferred_element_type=jnp.float32)

    @pl.when(k == pl.num_programs(0) - 1)
    def _finalize():
        # jax.nn.sigmoid: exp + reciprocal land on the EUP slot.
        o_ref[...] = jax.nn.sigmoid(acc_ref[...])


# ------------------------------ wrapper --------------------------------------
def prepare_params(w1, b1, w2, b2, *, tk=4096, tn=512, tk2=512,
                   compute_dtype=jnp.bfloat16):
    """Pad + bf16-cast the weights ONCE.  For a real model, call this at init
    and reuse the prepared params on every forward (hoists the ~w1-sized
    pad/cast HBM traffic out of the per-call path)."""
    F, H = w1.shape
    C = w2.shape[1]

    F_p = _round_up(F, 128)
    H_p = _round_up(H, 128)
    C_p = _round_up(C, 128)

    tk = _pick_tile(F_p, tk)                       # fc1 K tile (F reduction)
    tn = _pick_tile(H_p, tn)                       # fc1 H tile ("parallel")
    if tn == H_p and H_p >= 256:
        # Keep >= 2 H tiles so the parallel axis can use both v7x TensorCores.
        tn = _pick_tile(H_p, H_p // 2)
    tk2 = _pick_tile(H_p, tk2)                     # fc2 reduction tile (over H)

    return dict(
        w1=_pad_cast_2d(w1, F_p, H_p, compute_dtype),
        b1=_pad_cast_2d(b1.reshape(1, -1), 1, H_p, jnp.float32),
        w2=_pad_cast_2d(w2, H_p, C_p, compute_dtype),
        b2=_pad_cast_2d(b2.reshape(1, -1), 1, C_p, jnp.float32),
        F=F, H=H, C=C, F_p=F_p, H_p=H_p, C_p=C_p,
        tk=tk, tn=tn, tk2=tk2, compute_dtype=compute_dtype,
    )


def model_head_apply(params, x):
    """x: [B, ...] -> flattened [B, F]; returns sigmoid(fc2(relu(fc1(x))))."""
    F, C = params["F"], params["C"]
    F_p, H_p, C_p = params["F_p"], params["H_p"], params["C_p"]
    tk, tn, tk2 = params["tk"], params["tn"], params["tk2"]
    cdt = params["compute_dtype"]
    bf = jnp.dtype(cdt).itemsize

    B = x.shape[0]
    xf = x.reshape(B, -1)
    assert xf.shape[1] == F, (xf.shape, F)

    # bf16 min sublane tile is (16, 128): pad the (tiny) batch to 16.
    B_p = max(_round_up(B, 16), 16)
    x_p = _pad_cast_2d(xf, B_p, F_p, cdt)

    vmem_cap = _vmem_cap_bytes()

    # ---------------- fc1: h = relu(x @ w1 + b1) ----------------------------
    fc1_bytes = (2 * B_p * F_p * bf        # resident x panel (both buffers)
                 + 2 * tk * tn * bf        # streamed w1 tile, double-buffered
                 + 2 * H_p * 4             # resident b1 row
                 + 2 * B_p * tn * 4        # f32 h output tile, double-buffered
                 + B_p * tn * 4)           # f32 accumulator scratch
    fc1_vmem = int(min(max(fc1_bytes + (4 << 20), 8 << 20), vmem_cap))

    fc1_cost = pl.CostEstimate(
        flops=2 * B_p * F_p * H_p,
        transcendentals=0,
        bytes_accessed=(B_p * F_p * bf + F_p * H_p * bf
                        + H_p * 4 + B_p * H_p * 4))

    grid1 = (H_p // tn, F_p // tk)         # reduction axis (F) last

    h = pl.pallas_call(
        _make_fc1_kernel(tk, tn),
        out_shape=jax.ShapeDtypeStruct((B_p, H_p), jnp.float32),
        grid=grid1,
        in_specs=[
            pl.BlockSpec((B_p, F_p), lambda j, k: (0, 0)),   # x   (resident)
            pl.BlockSpec((tk, tn), lambda j, k: (k, j)),     # w1  (streamed)
            pl.BlockSpec((1, H_p), lambda j, k: (0, 0)),     # b1  (resident)
        ],
        out_specs=pl.BlockSpec((B_p, tn), lambda j, k: (0, j)),
        scratch_shapes=[pltpu.VMEM((B_p, tn), jnp.float32)],
        compiler_params=pltpu.CompilerParams(
            dimension_semantics=("parallel", "arbitrary"),
            vmem_limit_bytes=fc1_vmem),
        cost_estimate=fc1_cost,
    )(x_p, params["w1"], params["b1"])

    # ---------------- fc2: out = sigmoid(h @ w2 + b2) -----------------------
    fc2_bytes = (2 * B_p * tk2 * 4         # h chunk (f32), double-buffered
                 + 2 * tk2 * C_p * bf      # streamed w2 tile
                 + 2 * C_p * 4             # b2
                 + 2 * B_p * C_p * 4       # output
                 + B_p * C_p * 4)          # f32 accumulator scratch
    fc2_vmem = int(min(max(fc2_bytes + (2 << 20), 8 << 20), vmem_cap))

    fc2_cost = pl.CostEstimate(
        flops=2 * B_p * H_p * C_p,
        transcendentals=B_p * C_p,
        bytes_accessed=(B_p * H_p * 4 + H_p * C_p * bf
                        + C_p * 4 + B_p * C_p * 4))

    out_p = pl.pallas_call(
        fc2_kernel,
        out_shape=jax.ShapeDtypeStruct((B_p, C_p), jnp.float32),
        grid=(H_p // tk2,),                # pipeline the w2 stream
        in_specs=[
            pl.BlockSpec((B_p, tk2), lambda k: (0, k)),      # h chunk
            pl.BlockSpec((tk2, C_p), lambda k: (k, 0)),      # w2 (streamed)
            pl.BlockSpec((1, C_p), lambda k: (0, 0)),        # b2 (resident)
        ],
        out_specs=pl.BlockSpec((B_p, C_p), lambda k: (0, 0)),
        scratch_shapes=[pltpu.VMEM((B_p, C_p), jnp.float32)],
        compiler_params=pltpu.CompilerParams(
            dimension_semantics=("arbitrary",),
            vmem_limit_bytes=fc2_vmem),
        cost_estimate=fc2_cost,
    )(h, params["w2"], params["b2"])

    return out_p[:B, :C]


def model_head(x, w1, b1, w2, b2, **kwargs):
    """One-shot convenience wrapper (re-prepares weights every call).  Prefer
    prepare_params() once + model_head_apply() per forward."""
    return model_head_apply(prepare_params(w1, b1, w2, b2, **kwargs), x)


def model_head_ref(x, w1, b1, w2, b2, cast=jnp.float32):
    """Pure-JAX reference (optionally with the same bf16 streaming cast)."""
    xf = x.reshape(x.shape[0], -1).astype(cast).astype(jnp.float32)
    w1c = w1.astype(cast).astype(jnp.float32)
    w2c = w2.astype(cast).astype(jnp.float32)
    h = jnp.maximum(xf @ w1c + b1.astype(jnp.float32), 0.0)
    return jax.nn.sigmoid(h @ w2c + b2.astype(jnp.float32))


if __name__ == "__main__":
    # Small shapes consistent with the module: a VGG-ish feature map
    # [B, C, H, W] = [2, 4, 16, 16] flattened -> input_size = 1024.
    B, C_in, Hs, Ws = 2, 4, 16, 16
    input_size = C_in * Hs * Ws        # 1024
    hidden_size = 32
    num_classes = 2

    key = jax.random.PRNGKey(0)
    kx, k1, k2, k3, k4 = jax.random.split(key, 5)

    x = jax.random.normal(kx, (B, C_in, Hs, Ws), dtype=jnp.float32)

    # Deterministic param init (PyTorch Linear default: U(-1/sqrt(fan_in), +)).
    lim1 = 1.0 / jnp.sqrt(input_size)
    lim2 = 1.0 / jnp.sqrt(hidden_size)
    w1 = jax.random.uniform(k1, (input_size, hidden_size),
                            minval=-lim1, maxval=lim1, dtype=jnp.float32)
    b1 = jax.random.uniform(k2, (1, hidden_size),
                            minval=-lim1, maxval=lim1, dtype=jnp.float32)
    w2 = jax.random.uniform(k3, (hidden_size, num_classes),
                            minval=-lim2, maxval=lim2, dtype=jnp.float32)
    b2 = jax.random.uniform(k4, (1, num_classes),
                            minval=-lim2, maxval=lim2, dtype=jnp.float32)

    # Hoisted weight prep (pad + bf16 cast once), then the per-call kernels.
    params = prepare_params(w1, b1, w2, b2)
    out = jax.block_until_ready(model_head_apply(params, x))
    assert out.shape == (B, num_classes), out.shape

    # bf16-consistent reference (same streaming cast, f32 accumulation).
    ref_bf16 = model_head_ref(x, w1, b1, w2, b2, cast=jnp.bfloat16)
    assert jnp.allclose(out, ref_bf16, atol=1e-4, rtol=1e-4), "mismatch vs bf16 reference"

    # Full-f32 reference: only the bf16 cast error remains (loose tolerance).
    ref_f32 = model_head_ref(x, w1, b1, w2, b2, cast=jnp.float32)
    assert jnp.allclose(out, ref_f32, atol=2e-2, rtol=2e-2), "mismatch vs f32 reference"

    print("KERNEL_OK")
</pallas_src>

<mosaic_0001>
module attributes {stable_mosaic.version = 11 : i64} {
  func.func @fc1_kernel(%arg0: i32, %arg1: i32, %arg2: memref<16x1024xbf16, #tpu.memory_space<vmem>>, %arg3: memref<1024x128xbf16, #tpu.memory_space<vmem>>, %arg4: memref<1x128xf32, #tpu.memory_space<vmem>>, %arg5: memref<16x128xf32, #tpu.memory_space<vmem>>, %arg6: memref<16x128xf32, #tpu.memory_space<vmem>>) attributes {dimension_semantics = [#tpu.dimension_semantics<parallel>, #tpu.dimension_semantics<arbitrary>], iteration_bounds = array<i64: 1, 1>, scalar_prefetch = 0 : i64, scratch_operands = 1 : i64, tpu.core_type = #tpu.core_type<tc>, window_params = [{pipeline_mode = #tpu.pipeline_mode<synchronous>, transform_indices = @transform_0, window_bounds = array<i64: 16, 1024>}, {transform_indices = @transform_1, window_bounds = array<i64: 1024, 128>}, {pipeline_mode = #tpu.pipeline_mode<synchronous>, transform_indices = @transform_2, window_bounds = array<i64: 1, 128>}, {transform_indices = @transform_3, window_bounds = array<i64: 16, 128>}]} {
    %c0_i32 = arith.constant 0 : i32
    %0 = arith.cmpi eq, %arg1, %c0_i32 : i32
    %1 = arith.extui %0 : i1 to i32
    %c0_i32_0 = arith.constant 0 : i32
    %2 = arith.cmpi ne, %1, %c0_i32_0 : i32
    scf.if %2 {
      %c128_i32 = arith.constant 128 : i32
      %15 = arith.muli %arg0, %c128_i32 : i32
      %16 = tpu.assume_multiple %15, 128 : i32
      %c0_9 = arith.constant 0 : index
      %17 = arith.index_cast %16 : i32 to index
      %18 = vector.load %arg4[%c0_9, %17] : memref<1x128xf32, #tpu.memory_space<vmem>>, vector<1x128xf32>
      %19 = vector.shape_cast %18 : vector<1x128xf32> to vector<1x128xf32>
      %20 = vector.broadcast %19 : vector<1x128xf32> to vector<16x128xf32>
      %c0_10 = arith.constant 0 : index
      %c0_11 = arith.constant 0 : index
      %21 = vector.load %arg6[%c0_10, %c0_11] : memref<16x128xf32, #tpu.memory_space<vmem>>, vector<16x128xf32>
      tpu.vector_store %arg6[%c0_10, %c0_11], %20 {strides = array<i32>} : memref<16x128xf32, #tpu.memory_space<vmem>>, vector<16x128xf32>,
    } else {
    }
    %c1024_i32 = arith.constant 1024 : i32
    %3 = arith.muli %arg1, %c1024_i32 : i32
    %4 = tpu.assume_multiple %3, 1024 : i32
    %c0 = arith.constant 0 : index
    %5 = arith.index_cast %4 : i32 to index
    %6 = vector.load %arg2[%c0, %5] : memref<16x1024xbf16, #tpu.memory_space<vmem>>, vector<16x1024xbf16>
    %c0_1 = arith.constant 0 : index
    %c0_2 = arith.constant 0 : index
    %7 = vector.load %arg6[%c0_1, %c0_2] : memref<16x128xf32, #tpu.memory_space<vmem>>, vector<16x128xf32>
    %c0_3 = arith.constant 0 : index
    %c0_4 = arith.constant 0 : index
    %8 = vector.load %arg3[%c0_3, %c0_4] : memref<1024x128xbf16, #tpu.memory_space<vmem>>, vector<1024x128xbf16>
    %cst = arith.constant dense<0.000000e+00> : vector<16x128xf32>
    %9 = tpu.matmul %6, %8, %cst {dimension_numbers = #tpu.dot_dimension_numbers<[1], [0], [0], [1], [0, 0, 1, 1], [], []>} : vector<16x1024xbf16>, vector<1024x128xbf16>, vector<16x128xf32> -> vector<16x128xf32>
    %10 = arith.addf %7, %9 : vector<16x128xf32>
    %c0_5 = arith.constant 0 : index
    %c0_6 = arith.constant 0 : index
    %11 = vector.load %arg6[%c0_5, %c0_6] : memref<16x128xf32, #tpu.memory_space<vmem>>, vector<16x128xf32>
    tpu.vector_store %arg6[%c0_5, %c0_6], %10 {strides = array<i32>} : memref<16x128xf32, #tpu.memory_space<vmem>>, vector<16x128xf32>,
    %c0_i32_7 = arith.constant 0 : i32
    %12 = arith.cmpi eq, %arg1, %c0_i32_7 : i32
    %13 = arith.extui %12 : i1 to i32
    %c0_i32_8 = arith.constant 0 : i32
    %14 = arith.cmpi ne, %13, %c0_i32_8 : i32
    scf.if %14 {
      %c0_9 = arith.constant 0 : index
      %c0_10 = arith.constant 0 : index
      %15 = vector.load %arg6[%c0_9, %c0_10] : memref<16x128xf32, #tpu.memory_space<vmem>>, vector<16x128xf32>
      %cst_11 = arith.constant 0.000000e+00 : f32
      %16 = vector.broadcast %cst_11 : f32 to vector<16x128xf32>
      %17 = arith.maximumf %15, %16 : vector<16x128xf32>
      %c0_12 = arith.constant 0 : index
      %c0_13 = arith.constant 0 : index
      %18 = vector.load %arg5[%c0_12, %c0_13] : memref<16x128xf32, #tpu.memory_space<vmem>>, vector<16x128xf32>
      tpu.vector_store %arg5[%c0_12, %c0_13], %17 {strides = array<i32>} : memref<16x128xf32, #tpu.memory_space<vmem>>, vector<16x128xf32>,
    } else {
    }
    return
  }
  func.func @transform_0(%arg0: i32, %arg1: i32) -> (i32, i32) {
    %c0_i32 = arith.constant 0 : i32
    %c0_i32_0 = arith.constant 0 : i32
    %c0_i32_1 = arith.constant 0 : i32
    return %c0_i32, %c0_i32_0 : i32, i32
  }
  func.func @transform_1(%arg0: i32, %arg1: i32) -> (i32, i32) {
    %c0_i32 = arith.constant 0 : i32
    return %arg1, %arg0 : i32, i32
  }
  func.func @transform_2(%arg0: i32, %arg1: i32) -> (i32, i32) {
    %c0_i32 = arith.constant 0 : i32
    %c0_i32_0 = arith.constant 0 : i32
    %c0_i32_1 = arith.constant 0 : i32
    return %c0_i32, %c0_i32_0 : i32, i32
  }
  func.func @transform_3(%arg0: i32, %arg1: i32) -> (i32, i32) {
    %c0_i32 = arith.constant 0 : i32
    %c0_i32_0 = arith.constant 0 : i32
    return %c0_i32, %arg0 : i32, i32
  }
}

</mosaic_0001>

<llo_original>
// kernel: tpu_custom_call.1
$region0: #{tpu_custom_call.1}
  #allocation0 [shape = 'u32[]', space=smem, size = 0x4, offset = 0x4, fixed_abs, tag = 'smem constant byte address 0x4 - core index']
  #allocation1 [shape = 'u32[144,128]{1,0:T(1,128)}', space=vmem, size = 0x12000, scoped, tag = 'internal scratch']
  #allocation2 [shape = 'f32[16,128]{1,0:T(8,128)}', space=vmem, size = 0x2000, scoped, tag = 'scratch operand']
  %s0 = inlined_call_operand.hbm [shape: bf16[16,1024], index: 0, kind: input, shape index: {}]
  %s1 = inlined_call_operand.hbm [shape: bf16[1024,128], index: 1, kind: input, shape index: {}]
  %s2 = inlined_call_operand.vmem [shape: f32[1,128], index: 2, kind: input, shape index: {}]
  %s3 = inlined_call_operand.hbm [shape: f32[16,128], index: 3, kind: output, shape index: {}]
  %s4 = sld [smem:[#allocation0]]
  $region38: #{tpu_custom_call.1} parent=0
    _
  %s6 = ssub.s32 1, %s4
  %s7 = scalar_select 0, %s6, %s4
  $region1: #{tpu_custom_call.1} parent=0
    #allocation3 [shape = 'u8[32768]{0}', space=vmem, size = 0x8000, scoped, tag = 'input window, operand 0, single buffered']
    #allocation4 [shape = 's32[1]{0}', space=sflag, size = 0x4, scoped, tag = 'scoped memory for tpu_custom_call.1']
    #allocation5 [shape = 's32[1]{0}', space=sflag, size = 0x4, scoped, tag = 'scoped memory for tpu_custom_call.1']
    #allocation6 [shape = 'u8[262144]{0}', space=vmem, size = 0x40000, scoped, tag = 'input window, operand 1, single buffered']
    #allocation7 [shape = 's32[1]{0}', space=sflag, size = 0x4, scoped, tag = 'scoped memory for tpu_custom_call.1']
    #allocation8 [shape = 'u8[8192]{0}', space=vmem, size = 0x2000, scoped, tag = 'output window, operand 0, single buffered']
    %8 = vsyncpa [#allocation4], 0
    %9 = vsyncpa [#allocation7], 0
    %10 = vsyncpa [#allocation5], 0
    // Predicated region
    $region2: #{tpu_custom_call.1} parent=1 // pred_check
      _
    $region3: #{tpu_custom_call.1} parent=1 // pred_check_branch
      %12 = sbr.rel (0) target = $region5
    $region4: #{tpu_custom_call.1} parent=1 // pred_region
      %s14 = ssub.s32 1024, 1024
      %15 = vsyncadd [#allocation4], %s14
      %s16 = sshll.u32 [#allocation3], 4
      %s17 = int_to_ptr.vmem [resolvable:$true] %s16
      %22 = dma.hbm_to_vmem [thread:$0]  %s0, 1024, %s17, [#allocation4], 512, 512, 32
    $region5: #{tpu_custom_call.1} parent=1 // pred_fallthru
      _
    // Predicated region
    $region6: #{tpu_custom_call.1} parent=1 // pred_check
      _
    $region7: #{tpu_custom_call.1} parent=1 // pred_check_branch
      %24 = sbr.rel (0) target = $region9
    $region8: #{tpu_custom_call.1} parent=1 // pred_region
      %s26 = ssub.s32 8192, 8192
      %27 = vsyncadd [#allocation7], %s26
      %s28 = sshll.u32 [#allocation6], 4
      %s29 = int_to_ptr.vmem [resolvable:$true] %s28
      %34 = dma.hbm_to_vmem [thread:$0]  %s1, 8192, %s29, [#allocation7], 64, 64, 4
    $region9: #{tpu_custom_call.1} parent=1 // pred_fallthru
      _
    // Predicated region
    $region10: #{tpu_custom_call.1} parent=1 // pred_check
      _
    $region11: #{tpu_custom_call.1} parent=1 // pred_check_branch
      %36 = sbr.rel (0) target = $region13
    $region12: #{tpu_custom_call.1} parent=1 // pred_region
      _
    $region13: #{tpu_custom_call.1} parent=1 // pred_fallthru
      _
    // Predicated region
    $region14: #{tpu_custom_call.1} parent=1 // pred_check
      _
    $region15: #{tpu_custom_call.1} parent=1 // pred_check_branch
      %38 = sbr.rel (0) target = $region17
    $region16: #{tpu_custom_call.1} parent=1 // pred_region
      %39 = dma.done [#allocation4], 1024
    $region17: #{tpu_custom_call.1} parent=1 // pred_fallthru
      _
    // Predicated region
    $region18: #{tpu_custom_call.1} parent=1 // pred_check
      _
    $region19: #{tpu_custom_call.1} parent=1 // pred_check_branch
      %41 = sbr.rel (0) target = $region21
    $region20: #{tpu_custom_call.1} parent=1 // pred_region
      %42 = dma.done [#allocation7], 8192
    $region21: #{tpu_custom_call.1} parent=1 // pred_fallthru
      _
    %p44 = scmp.eq.s32.totalorder 0, 0
    // Predicated region
    $region22: #{tpu_custom_call.1} parent=1 // pred_check
      %p45 = pneg %p44
    $region23: #{tpu_custom_call.1} parent=1 // pred_check_branch
      %47 = sbr.rel (%p45) target = $region25
    $region24: #{tpu_custom_call.1} parent=1 // pred_region
      %s48 = smul.u32 0, 128
      %s49 = sshra.s32 %s48, 7
      %s50 = sand.u32 %s48, 127
      %s51 = scalar_lea.vmem %s2, %s49
      %v52 = vld [vmem:[%s51] sm:$0x1]
      %v54 = vlaneseq
      %v55 = vshrl.u32 %v54, 7
      %v56 = vsub.s32 0, %v55
      %v57 = vrot.slane %v52, %v56
      %59 = vst [vmem:[#allocation2] sm:$0xff] %v57
      %60 = vst [vmem:[#allocation2 + $0x8] sm:$0xff] %v57
    $region25: #{tpu_custom_call.1} parent=1 // pred_fallthru
      _
    %s61 = smul.u32 0, 1024
    %s62 = sshra.s32 %s61, 7
    %s63 = sand.u32 %s61, 127
    %s64 = smul.addr %s62, 4
    %s65 = scalar_lea.vmem [#allocation3], %s64
    %v66 = vld [vmem:[%s65] sm:$0xff]
    %v67 = vld [vmem:[%s65 + $0x8] sm:$0xff]
    %v68 = vld [vmem:[%s65 + $0x10] sm:$0xff]
    %v69 = vld [vmem:[%s65 + $0x18] sm:$0xff]
    %v70 = vld [vmem:[%s65 + $0x20] sm:$0xff]
    %v71 = vld [vmem:[%s65 + $0x28] sm:$0xff]
    %v72 = vld [vmem:[%s65 + $0x30] sm:$0xff]
    %v73 = vld [vmem:[%s65 + $0x38] sm:$0xff]
    %v74 = vld [vmem:[#allocation2] sm:$0xff]
    %v75 = vld [vmem:[#allocation2 + $0x8] sm:$0xff]
    %v76 = vld [vmem:[#allocation6] sm:$0xf]
    %v77 = vld [vmem:[#allocation6 + $0x4] sm:$0xf]
    %v78 = vld [vmem:[#allocation6 + $0x8] sm:$0xf]
    %v79 = vld [vmem:[#allocation6 + $0xc] sm:$0xf]
    %v80 = vld [vmem:[#allocation6 + $0x10] sm:$0xf]
    %v81 = vld [vmem:[#allocation6 + $0x14] sm:$0xf]
    %v82 = vld [vmem:[#allocation6 + $0x18] sm:$0xf]
    %v83 = vld [vmem:[#allocation6 + $0x1c] sm:$0xf]
    %v84 = vld [vmem:[#allocation6 + $0x20] sm:$0xf]
    %v85 = vld [vmem:[#allocation6 + $0x24] sm:$0xf]
    %v86 = vld [vmem:[#allocation6 + $0x28] sm:$0xf]
    %v87 = vld [vmem:[#allocation6 + $0x2c] sm:$0xf]
    %v88 = vld [vmem:[#allocation6 + $0x30] sm:$0xf]
    %v89 = vld [vmem:[#allocation6 + $0x34] sm:$0xf]
    %v90 = vld [vmem:[#allocation6 + $0x38] sm:$0xf]
    %v91 = vld [vmem:[#allocation6 + $0x3c] sm:$0xf]
    %v92 = vld [vmem:[#allocation6 + $0x40] sm:$0xf]
    %v93 = vld [vmem:[#allocation6 + $0x44] sm:$0xf]
    %v94 = vld [vmem:[#allocation6 + $0x48] sm:$0xf]
    %v95 = vld [vmem:[#allocation6 + $0x4c] sm:$0xf]
    %v96 = vld [vmem:[#allocation6 + $0x50] sm:$0xf]
    %v97 = vld [vmem:[#allocation6 + $0x54] sm:$0xf]
    %v98 = vld [vmem:[#allocation6 + $0x58] sm:$0xf]
    %v99 = vld [vmem:[#allocation6 + $0x5c] sm:$0xf]
    %v100 = vld [vmem:[#allocation6 + $0x60] sm:$0xf]
    %v101 = vld [vmem:[#allocation6 + $0x64] sm:$0xf]
    %v102 = vld [vmem:[#allocation6 + $0x68] sm:$0xf]
    %v103 = vld [vmem:[#allocation6 + $0x6c] sm:$0xf]
    %v104 = vld [vmem:[#allocation6 + $0x70] sm:$0xf]
    %v105 = vld [vmem:[#allocation6 + $0x74] sm:$0xf]
    %v106 = vld [vmem:[#allocation6 + $0x78] sm:$0xf]
    %v107 = vld [vmem:[#allocation6 + $0x7c] sm:$0xf]
    %v108 = vld [vmem:[#allocation6 + $0x80] sm:$0xf]
    %v109 = vld [vmem:[#allocation6 + $0x84] sm:$0xf]
    %v110 = vld [vmem:[#allocation6 + $0x88] sm:$0xf]
    %v111 = vld [vmem:[#allocation6 + $0x8c] sm:$0xf]
    %v112 = vld [vmem:[#allocation6 + $0x90] sm:$0xf]
    %v113 = vld [vmem:[#allocation6 + $0x94] sm:$0xf]
    %v114 = vld [vmem:[#allocation6 + $0x98] sm:$0xf]
    %v115 = vld [vmem:[#allocation6 + $0x9c] sm:$0xf]
    %v116 = vld [vmem:[#allocation6 + $0xa0] sm:$0xf]
    %v117 = vld [vmem:[#allocation6 + $0xa4] sm:$0xf]
    %v118 = vld [vmem:[#allocation6 + $0xa8] sm:$0xf]
    %v119 = vld [vmem:[#allocation6 + $0xac] sm:$0xf]
    %v120 = vld [vmem:[#allocation6 + $0xb0] sm:$0xf]
    %v121 = vld [vmem:[#allocation6 + $0xb4] sm:$0xf]
    %v122 = vld [vmem:[#allocation6 + $0xb8] sm:$0xf]
    %v123 = vld [vmem:[#allocation6 + $0xbc] sm:$0xf]
    %v124 = vld [vmem:[#allocation6 + $0xc0] sm:$0xf]
    %v125 = vld [vmem:[#allocation6 + $0xc4] sm:$0xf]
    %v126 = vld [vmem:[#allocation6 + $0xc8] sm:$0xf]
    %v127 = vld [vmem:[#allocation6 + $0xcc] sm:$0xf]
    %v128 = vld [vmem:[#allocation6 + $0xd0] sm:$0xf]
    %v129 = vld [vmem:[#allocation6 + $0xd4] sm:$0xf]
    %v130 = vld [vmem:[#allocation6 + $0xd8] sm:$0xf]
    %v131 = vld [vmem:[#allocation6 + $0xdc] sm:$0xf]
    %v132 = vld [vmem:[#allocation6 + $0xe0] sm:$0xf]
    %v133 = vld [vmem:[#allocation6 + $0xe4] sm:$0xf]
    %v134 = vld [vmem:[#allocation6 + $0xe8] sm:$0xf]
    %v135 = vld [vmem:[#allocation6 + $0xec] sm:$0xf]
    %v136 = vld [vmem:[#allocation6 + $0xf0] sm:$0xf]
    %v137 = vld [vmem:[#allocation6 + $0xf4] sm:$0xf]
    %v138 = vld [vmem:[#allocation6 + $0xf8] sm:$0xf]
    %v139 = vld [vmem:[#allocation6 + $0xfc] sm:$0xf]
    %v140 = vld [vmem:[#allocation6 + $0x100] sm:$0xf]
    %v141 = vld [vmem:[#allocation6 + $0x104] sm:$0xf]
    %v142 = vld [vmem:[#allocation6 + $0x108] sm:$0xf]
    %v143 = vld [vmem:[#allocation6 + $0x10c] sm:$0xf]
    %v144 = vld [vmem:[#allocation6 + $0x110] sm:$0xf]
    %v145 = vld [vmem:[#allocation6 + $0x114] sm:$0xf]
    %v146 = vld [vmem:[#allocation6 + $0x118] sm:$0xf]
    %v147 = vld [vmem:[#allocation6 + $0x11c] sm:$0xf]
    %v148 = vld [vmem:[#allocation6 + $0x120] sm:$0xf]
    %v149 = vld [vmem:[#allocation6 + $0x124] sm:$0xf]
    %v150 = vld [vmem:[#allocation6 + $0x128] sm:$0xf]
    %v151 = vld [vmem:[#allocation6 + $0x12c] sm:$0xf]
    %v152 = vld [vmem:[#allocation6 + $0x130] sm:$0xf]
    %v153 = vld [vmem:[#allocation6 + $0x134] sm:$0xf]
    %v154 = vld [vmem:[#allocation6 + $0x138] sm:$0xf]
    %v155 = vld [vmem:[#allocation6 + $0x13c] sm:$0xf]
    %v156 = vld [vmem:[#allocation6 + $0x140] sm:$0xf]
    %v157 = vld [vmem:[#allocation6 + $0x144] sm:$0xf]
    %v158 = vld [vmem:[#allocation6 + $0x148] sm:$0xf]
    %v159 = vld [vmem:[#allocation6 + $0x14c] sm:$0xf]
    %v160 = vld [vmem:[#allocation6 + $0x150] sm:$0xf]
    %v161 = vld [vmem:[#allocation6 + $0x154] sm:$0xf]
    %v162 = vld [vmem:[#allocation6 + $0x158] sm:$0xf]
    %v163 = vld [vmem:[#allocation6 + $0x15c] sm:$0xf]
    %v164 = vld [vmem:[#allocation6 + $0x160] sm:$0xf]
    %v165 = vld [vmem:[#allocation6 + $0x164] sm:$0xf]
    %v166 = vld [vmem:[#allocation6 + $0x168] sm:$0xf]
    %v167 = vld [vmem:[#allocation6 + $0x16c] sm:$0xf]
    %v168 = vld [vmem:[#allocation6 + $0x170] sm:$0xf]
    %v169 = vld [vmem:[#allocation6 + $0x174] sm:$0xf]
    %v170 = vld [vmem:[#allocation6 + $0x178] sm:$0xf]
    %v171 = vld [vmem:[#allocation6 + $0x17c] sm:$0xf]
    %v172 = vld [vmem:[#allocation6 + $0x180] sm:$0xf]
    %v173 = vld [vmem:[#allocation6 + $0x184] sm:$0xf]
    %v174 = vld [vmem:[#allocation6 + $0x188] sm:$0xf]
    %v175 = vld [vmem:[#allocation6 + $0x18c] sm:$0xf]
    %v176 = vld [vmem:[#allocation6 + $0x190] sm:$0xf]
    %v177 = vld [vmem:[#allocation6 + $0x194] sm:$0xf]
    %v178 = vld [vmem:[#allocation6 + $0x198] sm:$0xf]
    %v179 = vld [vmem:[#allocation6 + $0x19c] sm:$0xf]
    %v180 = vld [vmem:[#allocation6 + $0x1a0] sm:$0xf]
    %v181 = vld [vmem:[#allocation6 + $0x1a4] sm:$0xf]
    %v182 = vld [vmem:[#allocation6 + $0x1a8] sm:$0xf]
    %v183 = vld [vmem:[#allocation6 + $0x1ac] sm:$0xf]
    %v184 = vld [vmem:[#allocation6 + $0x1b0] sm:$0xf]
    %v185 = vld [vmem:[#allocation6 + $0x1b4] sm:$0xf]
    %v186 = vld [vmem:[#allocation6 + $0x1b8] sm:$0xf]
    %v187 = vld [vmem:[#allocation6 + $0x1bc] sm:$0xf]
    %v188 = vld [vmem:[#allocation6 + $0x1c0] sm:$0xf]
    %v189 = vld [vmem:[#allocation6 + $0x1c4] sm:$0xf]
    %v190 = vld [vmem:[#allocation6 + $0x1c8] sm:$0xf]
    %v191 = vld [vmem:[#allocation6 + $0x1cc] sm:$0xf]
    %v192 = vld [vmem:[#allocation6 + $0x1d0] sm:$0xf]
    %v193 = vld [vmem:[#allocation6 + $0x1d4] sm:$0xf]
    %v194 = vld [vmem:[#allocation6 + $0x1d8] sm:$0xf]
    %v195 = vld [vmem:[#allocation6 + $0x1dc] sm:$0xf]
    %v196 = vld [vmem:[#allocation6 + $0x1e0] sm:$0xf]
    %v197 = vld [vmem:[#allocation6 + $0x1e4] sm:$0xf]
    %v198 = vld [vmem:[#allocation6 + $0x1e8] sm:$0xf]
    %v199 = vld [vmem:[#allocation6 + $0x1ec] sm:$0xf]
    %v200 = vld [vmem:[#allocation6 + $0x1f0] sm:$0xf]
    %v201 = vld [vmem:[#allocation6 + $0x1f4] sm:$0xf]
    %v202 = vld [vmem:[#allocation6 + $0x1f8] sm:$0xf]
    %v203 = vld [vmem:[#allocation6 + $0x1fc] sm:$0xf]
    %v212 = vunpack.c.l.b16 %v66
    %v213 = vunpack.c.h.b16 %v66
    %v214 = vunpack.c.l.b16 %v67
    %v215 = vunpack.c.h.b16 %v67
    %v216 = vunpack.c.l.b16 %v68
    %v217 = vunpack.c.h.b16 %v68
    %v218 = vunpack.c.l.b16 %v69
    %v219 = vunpack.c.h.b16 %v69
    %v220 = vunpack.c.l.b16 %v70
    %v221 = vunpack.c.h.b16 %v70
    %v222 = vunpack.c.l.b16 %v71
    %v223 = vunpack.c.h.b16 %v71
    %v224 = vunpack.c.l.b16 %v72
    %v225 = vunpack.c.h.b16 %v72
    %v226 = vunpack.c.l.b16 %v73
    %v227 = vunpack.c.h.b16 %v73
    %v228 = vpack.c.b16 %v220, %v212
    %v229 = vpack.c.b16 %v221, %v213
    %v230 = vpack.c.b16 %v222, %v214
    %v231 = vpack.c.b16 %v223, %v215
    %v232 = vpack.c.b16 %v224, %v216
    %v233 = vpack.c.b16 %v225, %v217
    %v234 = vpack.c.b16 %v226, %v218
    %v235 = vpack.c.b16 %v227, %v219
    %v372 = vunpack.c.l.b16 %v76
    %v373 = vunpack.c.l.b16 %v77
    %v374 = vunpack.c.l.b16 %v78
    %v375 = vunpack.c.l.b16 %v79
    %v376 = vunpack.c.l.b16 %v80
    %v377 = vunpack.c.l.b16 %v81
    %v378 = vunpack.c.l.b16 %v82
    %v379 = vunpack.c.l.b16 %v83
    %v380 = vunpack.c.l.b16 %v84
    %v381 = vunpack.c.l.b16 %v85
    %v382 = vunpack.c.l.b16 %v86
    %v383 = vunpack.c.l.b16 %v87
    %v384 = vunpack.c.l.b16 %v88
    %v385 = vunpack.c.l.b16 %v89
    %v386 = vunpack.c.l.b16 %v90
    %v387 = vunpack.c.l.b16 %v91
    %v388 = vunpack.c.l.b16 %v92
    %v389 = vunpack.c.l.b16 %v93
    %v390 = vunpack.c.l.b16 %v94
    %v391 = vunpack.c.l.b16 %v95
    %v392 = vunpack.c.l.b16 %v96
    %v393 = vunpack.c.l.b16 %v97
    %v394 = vunpack.c.l.b16 %v98
    %v395 = vunpack.c.l.b16 %v99
    %v396 = vunpack.c.l.b16 %v100
    %v397 = vunpack.c.l.b16 %v101
    %v398 = vunpack.c.l.b16 %v102
    %v399 = vunpack.c.l.b16 %v103
    %v400 = vunpack.c.l.b16 %v104
    %v401 = vunpack.c.l.b16 %v105
    %v402 = vunpack.c.l.b16 %v106
    %v403 = vunpack.c.l.b16 %v107
    %v404 = vunpack.c.l.b16 %v108
    %v405 = vunpack.c.l.b16 %v109
    %v406 = vunpack.c.l.b16 %v110
    %v407 = vunpack.c.l.b16 %v111
    %v408 = vunpack.c.l.b16 %v112
    %v409 = vunpack.c.l.b16 %v113
    %v410 = vunpack.c.l.b16 %v114
    %v411 = vunpack.c.l.b16 %v115
    %v412 = vunpack.c.l.b16 %v116
    %v413 = vunpack.c.l.b16 %v117
    %v414 = vunpack.c.l.b16 %v118
    %v415 = vunpack.c.l.b16 %v119
    %v416 = vunpack.c.l.b16 %v120
    %v417 = vunpack.c.l.b16 %v121
    %v418 = vunpack.c.l.b16 %v122
    %v419 = vunpack.c.l.b16 %v123
    %v420 = vunpack.c.l.b16 %v124
    %v421 = vunpack.c.l.b16 %v125
    %v422 = vunpack.c.l.b16 %v126
    %v423 = vunpack.c.l.b16 %v127
    %v424 = vunpack.c.l.b16 %v128
    %v425 = vunpack.c.l.b16 %v129
    %v426 = vunpack.c.l.b16 %v130
    %v427 = vunpack.c.l.b16 %v131
    %v428 = vunpack.c.l.b16 %v132
    %v429 = vunpack.c.l.b16 %v133
    %v430 = vunpack.c.l.b16 %v134
    %v431 = vunpack.c.l.b16 %v135
    %v432 = vunpack.c.l.b16 %v136
    %v433 = vunpack.c.l.b16 %v137
    %v434 = vunpack.c.l.b16 %v138
    %v435 = vunpack.c.l.b16 %v139
    %v436 = vunpack.c.l.b16 %v140
    %v437 = vunpack.c.l.b16 %v141
    %v438 = vunpack.c.l.b16 %v142
    %v439 = vunpack.c.l.b16 %v143
    %v440 = vunpack.c.l.b16 %v144
    %v441 = vunpack.c.l.b16 %v145
    %v442 = vunpack.c.l.b16 %v146
    %v443 = vunpack.c.l.b16 %v147
    %v444 = vunpack.c.l.b16 %v148
    %v445 = vunpack.c.l.b16 %v149
    %v446 = vunpack.c.l.b16 %v150
    %v447 = vunpack.c.l.b16 %v151
    %v448 = vunpack.c.l.b16 %v152
    %v449 = vunpack.c.l.b16 %v153
    %v450 = vunpack.c.l.b16 %v154
    %v451 = vunpack.c.l.b16 %v155
    %v452 = vunpack.c.l.b16 %v156
    %v453 = vunpack.c.l.b16 %v157
    %v454 = vunpack.c.l.b16 %v158
    %v455 = vunpack.c.l.b16 %v159
    %v456 = vunpack.c.l.b16 %v160
    %v457 = vunpack.c.l.b16 %v161
    %v458 = vunpack.c.l.b16 %v162
    %v459 = vunpack.c.l.b16 %v163
    %v460 = vunpack.c.l.b16 %v164
    %v461 = vunpack.c.l.b16 %v165
    %v462 = vunpack.c.l.b16 %v166
    %v463 = vunpack.c.l.b16 %v167
    %v464 = vunpack.c.l.b16 %v168
    %v465 = vunpack.c.l.b16 %v169
    %v466 = vunpack.c.l.b16 %v170
    %v467 = vunpack.c.l.b16 %v171
    %v468 = vunpack.c.l.b16 %v172
    %v469 = vunpack.c.l.b16 %v173
    %v470 = vunpack.c.l.b16 %v174
    %v471 = vunpack.c.l.b16 %v175
    %v472 = vunpack.c.l.b16 %v176
    %v473 = vunpack.c.l.b16 %v177
    %v474 = vunpack.c.l.b16 %v178
    %v475 = vunpack.c.l.b16 %v179
    %v476 = vunpack.c.l.b16 %v180
    %v477 = vunpack.c.l.b16 %v181
    %v478 = vunpack.c.l.b16 %v182
    %v479 = vunpack.c.l.b16 %v183
    %v480 = vunpack.c.l.b16 %v184
    %v481 = vunpack.c.l.b16 %v185
    %v482 = vunpack.c.l.b16 %v186
    %v483 = vunpack.c.l.b16 %v187
    %v484 = vunpack.c.l.b16 %v188
    %v485 = vunpack.c.l.b16 %v189
    %v486 = vunpack.c.l.b16 %v190
    %v487 = vunpack.c.l.b16 %v191
    %v488 = vunpack.c.l.b16 %v192
    %v489 = vunpack.c.l.b16 %v193
    %v490 = vunpack.c.l.b16 %v194
    %v491 = vunpack.c.l.b16 %v195
    %v492 = vunpack.c.l.b16 %v196
    %v493 = vunpack.c.l.b16 %v197
    %v494 = vunpack.c.l.b16 %v198
    %v495 = vunpack.c.l.b16 %v199
    %v496 = vunpack.c.l.b16 %v200
    %v497 = vunpack.c.l.b16 %v201
    %v498 = vunpack.c.l.b16 %v202
    %v499 = vunpack.c.l.b16 %v203
    %v500 = vpack.c.b16 %v373, %v372
    %v501 = vpack.c.b16 %v375, %v374
    %v502 = vpack.c.b16 %v377, %v376
    %v503 = vpack.c.b16 %v379, %v378
    %v504 = vpack.c.b16 %v381, %v380
    %v505 = vpack.c.b16 %v383, %v382
    %v506 = vpack.c.b16 %v385, %v384
    %v507 = vpack.c.b16 %v387, %v386
    %v508 = vpack.c.b16 %v389, %v388
    %v509 = vpack.c.b16 %v391, %v390
    %v510 = vpack.c.b16 %v393, %v392
    %v511 = vpack.c.b16 %v395, %v394
    %v512 = vpack.c.b16 %v397, %v396
    %v513 = vpack.c.b16 %v399, %v398
    %v514 = vpack.c.b16 %v401, %v400
    %v515 = vpack.c.b16 %v403, %v402
    %v516 = vpack.c.b16 %v405, %v404
    %v517 = vpack.c.b16 %v407, %v406
    %v518 = vpack.c.b16 %v409, %v408
    %v519 = vpack.c.b16 %v411, %v410
    %v520 = vpack.c.b16 %v413, %v412
    %v521 = vpack.c.b16 %v415, %v414
    %v522 = vpack.c.b16 %v417, %v416
    %v523 = vpack.c.b16 %v419, %v418
    %v524 = vpack.c.b16 %v421, %v420
    %v525 = vpack.c.b16 %v423, %v422
    %v526 = vpack.c.b16 %v425, %v424
    %v527 = vpack.c.b16 %v427, %v426
    %v528 = vpack.c.b16 %v429, %v428
    %v529 = vpack.c.b16 %v431, %v430
    %v530 = vpack.c.b16 %v433, %v432
    %v531 = vpack.c.b16 %v435, %v434
    %v532 = vpack.c.b16 %v437, %v436
    %v533 = vpack.c.b16 %v439, %v438
    %v534 = vpack.c.b16 %v441, %v440
    %v535 = vpack.c.b16 %v443, %v442
    %v536 = vpack.c.b16 %v445, %v444
    %v537 = vpack.c.b16 %v447, %v446
    %v538 = vpack.c.b16 %v449, %v448
    %v539 = vpack.c.b16 %v451, %v450
    %v540 = vpack.c.b16 %v453, %v452
    %v541 = vpack.c.b16 %v455, %v454
    %v542 = vpack.c.b16 %v457, %v456
    %v543 = vpack.c.b16 %v459, %v458
    %v544 = vpack.c.b16 %v461, %v460
    %v545 = vpack.c.b16 %v463, %v462
    %v546 = vpack.c.b16 %v465, %v464
    %v547 = vpack.c.b16 %v467, %v466
    %v548 = vpack.c.b16 %v469, %v468
    %v549 = vpack.c.b16 %v471, %v470
    %v550 = vpack.c.b16 %v473, %v472
    %v551 = vpack.c.b16 %v475, %v474
    %v552 = vpack.c.b16 %v477, %v476
    %v553 = vpack.c.b16 %v479, %v478
    %v554 = vpack.c.b16 %v481, %v480
    %v555 = vpack.c.b16 %v483, %v482
    %v556 = vpack.c.b16 %v485, %v484
    %v557 = vpack.c.b16 %v487, %v486
    %v558 = vpack.c.b16 %v489, %v488
    %v559 = vpack.c.b16 %v491, %v490
    %v560 = vpack.c.b16 %v493, %v492
    %v561 = vpack.c.b16 %v495, %v494
    %v562 = vpack.c.b16 %v497, %v496
    %v563 = vpack.c.b16 %v499, %v498
    %628 = vmatprep.subr.bf16.mxu0 0
    %629 = vmatpush1.bf16.msra.mxu0 %v507
    %630 = vmatprep.subr.bf16.mxu0 0
    %631 = vmatpush1.bf16.msra.mxu0 %v506
    %632 = vmatprep.subr.bf16.mxu0 0
    %633 = vmatpush1.bf16.msra.mxu0 %v505
    %634 = vmatprep.subr.bf16.mxu0 0
    %635 = vmatpush1.bf16.msra.mxu0 %v504
    %636 = vmatprep.subr.bf16.mxu0 0
    %637 = vmatpush1.bf16.msra.mxu0 %v503
    %638 = vmatprep.subr.bf16.mxu0 0
    %639 = vmatpush1.bf16.msra.mxu0 %v502
    %640 = vmatprep.subr.bf16.mxu0 0
    %641 = vmatpush1.bf16.msra.mxu0 %v501
    %642 = vmatprep.subr.bf16.mxu0 0
    %643 = vmatpush1.bf16.msra.mxu0 %v500
    %644 = vmatprep.subr.bf16.mxu0 0
    %645 = vmatpush2.bf16.msra.mxu0 %v515
    %646 = vmatprep.subr.bf16.mxu0 0
    %647 = vmatpush2.bf16.msra.mxu0 %v514
    %648 = vmatprep.subr.bf16.mxu0 0
    %649 = vmatpush2.bf16.msra.mxu0 %v513
    %650 = vmatprep.subr.bf16.mxu0 0
    %651 = vmatpush2.bf16.msra.mxu0 %v512
    %652 = vmatprep.subr.bf16.mxu0 0
    %653 = vmatpush2.bf16.msra.mxu0 %v511
    %654 = vmatprep.subr.bf16.mxu0 0
    %655 = vmatpush2.bf16.msra.mxu0 %v510
    %656 = vmatprep.subr.bf16.mxu0 0
    %657 = vmatpush2.bf16.msra.mxu0 %v509
    %658 = vmatprep.subr.bf16.mxu0 0
    %659 = vmatpush2.bf16.msra.mxu0 %v508
    %660 = vmatprep.mubr.bf16.mxu0 %v229
    %661 = vmatmul.mubr.bf16.gmra.mxu0 %v228
    %v662 = vpop.f32.mrf.mxu0
    %v663 = vadd.f32 0.0, %v662
    %v664 = vpop.f32.mrf.mxu0
    %v665 = vpop.f32.mrf.mxu0
    %v666 = vadd.f32 0.0, %v665
    %v667 = vpop.f32.mrf.mxu0
    %668 = vdwg.mxu0
    %669 = vmatprep.subr.bf16.mxu0 0
    %670 = vmatpush1.bf16.msra.mxu0 %v523
    %671 = vmatprep.subr.bf16.mxu0 0
    %672 = vmatpush1.bf16.msra.mxu0 %v522
    %673 = vmatprep.subr.bf16.mxu0 0
    %674 = vmatpush1.bf16.msra.mxu0 %v521
    %675 = vmatprep.subr.bf16.mxu0 0
    %676 = vmatpush1.bf16.msra.mxu0 %v520
    %677 = vmatprep.subr.bf16.mxu0 0
    %678 = vmatpush1.bf16.msra.mxu0 %v519
    %679 = vmatprep.subr.bf16.mxu0 0
    %680 = vmatpush1.bf16.msra.mxu0 %v518
    %681 = vmatprep.subr.bf16.mxu0 0
    %682 = vmatpush1.bf16.msra.mxu0 %v517
    %683 = vmatprep.subr.bf16.mxu0 0
    %684 = vmatpush1.bf16.msra.mxu0 %v516
    %685 = vmatprep.subr.bf16.mxu0 0
    %686 = vmatpush2.bf16.msra.mxu0 %v531
    %687 = vmatprep.subr.bf16.mxu0 0
    %688 = vmatpush2.bf16.msra.mxu0 %v530
    %689 = vmatprep.subr.bf16.mxu0 0
    %690 = vmatpush2.bf16.msra.mxu0 %v529
    %691 = vmatprep.subr.bf16.mxu0 0
    %692 = vmatpush2.bf16.msra.mxu0 %v528
    %693 = vmatprep.subr.bf16.mxu0 0
    %694 = vmatpush2.bf16.msra.mxu0 %v527
    %695 = vmatprep.subr.bf16.mxu0 0
    %696 = vmatpush2.bf16.msra.mxu0 %v526
    %697 = vmatprep.subr.bf16.mxu0 0
    %698 = vmatpush2.bf16.msra.mxu0 %v525
    %699 = vmatprep.subr.bf16.mxu0 0
    %700 = vmatpush2.bf16.msra.mxu0 %v524
    %701 = vmatprep.mubr.bf16.mxu0 %v231
    %702 = vmatmul.mubr.bf16.gmra.mxu0 %v230
    %v703 = vpop.f32.mrf.mxu0
    %v704 = vadd.f32 %v663, %v703
    %v705 = vpop.f32.mrf.mxu0
    %v706 = vpop.f32.mrf.mxu0
    %v707 = vadd.f32 %v666, %v706
    %v708 = vpop.f32.mrf.mxu0
    %709 = vdwg.mxu0
    %710 = vmatprep.subr.bf16.mxu0 0
    %711 = vmatpush1.bf16.msra.mxu0 %v539
    %712 = vmatprep.subr.bf16.mxu0 0
    %713 = vmatpush1.bf16.msra.mxu0 %v538
    %714 = vmatprep.subr.bf16.mxu0 0
    %715 = vmatpush1.bf16.msra.mxu0 %v537
    %716 = vmatprep.subr.bf16.mxu0 0
    %717 = vmatpush1.bf16.msra.mxu0 %v536
    %718 = vmatprep.subr.bf16.mxu0 0
    %719 = vmatpush1.bf16.msra.mxu0 %v535
    %720 = vmatprep.subr.bf16.mxu0 0
    %721 = vmatpush1.bf16.msra.mxu0 %v534
    %722 = vmatprep.subr.bf16.mxu0 0
    %723 = vmatpush1.bf16.msra.mxu0 %v533
    %724 = vmatprep.subr.bf16.mxu0 0
    %725 = vmatpush1.bf16.msra.mxu0 %v532
    %726 = vmatprep.subr.bf16.mxu0 0
    %727 = vmatpush2.bf16.msra.mxu0 %v547
    %728 = vmatprep.subr.bf16.mxu0 0
    %729 = vmatpush2.bf16.msra.mxu0 %v546
    %730 = vmatprep.subr.bf16.mxu0 0
    %731 = vmatpush2.bf16.msra.mxu0 %v545
    %732 = vmatprep.subr.bf16.mxu0 0
    %733 = vmatpush2.bf16.msra.mxu0 %v544
    %734 = vmatprep.subr.bf16.mxu0 0
    %735 = vmatpush2.bf16.msra.mxu0 %v543
    %736 = vmatprep.subr.bf16.mxu0 0
    %737 = vmatpush2.bf16.msra.mxu0 %v542
    %738 = vmatprep.subr.bf16.mxu0 0
    %739 = vmatpush2.bf16.msra.mxu0 %v541
    %740 = vmatprep.subr.bf16.mxu0 0
    %741 = vmatpush2.bf16.msra.mxu0 %v540
    %742 = vmatprep.mubr.bf16.mxu0 %v233
    %743 = vmatmul.mubr.bf16.gmra.mxu0 %v232
    %v744 = vpop.f32.mrf.mxu0
    %v745 = vadd.f32 %v704, %v744
    %v746 = vpop.f32.mrf.mxu0
    %v747 = vpop.f32.mrf.mxu0
    %v748 = vadd.f32 %v707, %v747
    %v749 = vpop.f32.mrf.mxu0
    %750 = vdwg.mxu0
    %751 = vmatprep.subr.bf16.mxu0 0
    %752 = vmatpush1.bf16.msra.mxu0 %v555
    %753 = vmatprep.subr.bf16.mxu0 0
    %754 = vmatpush1.bf16.msra.mxu0 %v554
    %755 = vmatprep.subr.bf16.mxu0 0
    %756 = vmatpush1.bf16.msra.mxu0 %v553
    %757 = vmatprep.subr.bf16.mxu0 0
    %758 = vmatpush1.bf16.msra.mxu0 %v552
    %759 = vmatprep.subr.bf16.mxu0 0
    %760 = vmatpush1.bf16.msra.mxu0 %v551
    %761 = vmatprep.subr.bf16.mxu0 0
    %762 = vmatpush1.bf16.msra.mxu0 %v550
    %763 = vmatprep.subr.bf16.mxu0 0
    %764 = vmatpush1.bf16.msra.mxu0 %v549
    %765 = vmatprep.subr.bf16.mxu0 0
    %766 = vmatpush1.bf16.msra.mxu0 %v548
    %767 = vmatprep.subr.bf16.mxu0 0
    %768 = vmatpush2.bf16.msra.mxu0 %v563
    %769 = vmatprep.subr.bf16.mxu0 0
    %770 = vmatpush2.bf16.msra.mxu0 %v562
    %771 = vmatprep.subr.bf16.mxu0 0
    %772 = vmatpush2.bf16.msra.mxu0 %v561
    %773 = vmatprep.subr.bf16.mxu0 0
    %774 = vmatpush2.bf16.msra.mxu0 %v560
    %775 = vmatprep.subr.bf16.mxu0 0
    %776 = vmatpush2.bf16.msra.mxu0 %v559
    %777 = vmatprep.subr.bf16.mxu0 0
    %778 = vmatpush2.bf16.msra.mxu0 %v558
    %779 = vmatprep.subr.bf16.mxu0 0
    %780 = vmatpush2.bf16.msra.mxu0 %v557
    %781 = vmatprep.subr.bf16.mxu0 0
    %782 = vmatpush2.bf16.msra.mxu0 %v556
    %783 = vmatprep.mubr.bf16.mxu0 %v235
    %784 = vmatmul.mubr.bf16.gmra.mxu0 %v234
    %v785 = vpop.f32.mrf.mxu0
    %v786 = vadd.f32 %v745, %v785
    %v787 = vpop.f32.mrf.mxu0
    %v788 = vpop.f32.mrf.mxu0
    %v789 = vadd.f32 %v748, %v788
    %v790 = vpop.f32.mrf.mxu0
    %791 = vdwg.mxu0
    %v792 = vadd.f32 %v74, %v786
    %v793 = vadd.f32 %v75, %v789
    %794 = vst [vmem:[#allocation2] sm:$0xff] %v792
    %795 = vst [vmem:[#allocation2 + $0x8] sm:$0xff] %v793
    // Predicated region
    $region26: #{tpu_custom_call.1} parent=1 // pred_check
      %p796 = pneg %p44
    $region27: #{tpu_custom_call.1} parent=1 // pred_check_branch
      %798 = sbr.rel (%p796) target = $region29
    $region28: #{tpu_custom_call.1} parent=1 // pred_region
      %v799 = vld [vmem:[#allocation2] sm:$0xff]
      %v800 = vld [vmem:[#allocation2 + $0x8] sm:$0xff]
      %v801 = vmax.f32 %v799, 0.0
      %v802 = vmax.f32 %v800, 0.0
      %803 = vst [vmem:[#allocation8] sm:$0xff] %v801
      %804 = vst [vmem:[#allocation8 + $0x8] sm:$0xff] %v802
    $region29: #{tpu_custom_call.1} parent=1 // pred_fallthru
      _
    // Predicated region
    $region30: #{tpu_custom_call.1} parent=1 // pred_check
      _
    $region31: #{tpu_custom_call.1} parent=1 // pred_check_branch
      %806 = sbr.rel (0) target = $region33
    $region32: #{tpu_custom_call.1} parent=1 // pred_region
      %s808 = ssub.s32 256, 256
      %809 = vsyncadd [#allocation5], %s808
      %s810 = sshll.u32 [#allocation8], 4
      %s811 = int_to_ptr.vmem [resolvable:$true] %s810
      %816 = dma.vmem_to_hbm [thread:$0]  %s811, 256, %s3, [#allocation5], 128, 128, 8
    $region33: #{tpu_custom_call.1} parent=1 // pred_fallthru
      _
    // Predicated region
    $region34: #{tpu_custom_call.1} parent=1 // pred_check
      _
    $region35: #{tpu_custom_call.1} parent=1 // pred_check_branch
      %818 = sbr.rel (0) target = $region37
    $region36: #{tpu_custom_call.1} parent=1 // pred_region
      %819 = dma.done [#allocation5], 256
    $region37: #{tpu_custom_call.1} parent=1 // pred_fallthru
      _
    %820 = vsyncpa [#allocation4], 1
    %821 = vsyncpa [#allocation7], 1
    %822 = vsyncpa [#allocation5], 1

</llo_original>
